<compile_context>
chip_gen: v7x
topology: tpu7x:2x2x1
jax: 0.10.0
libtpu: 0.0.40
codegen_flags: <defaults>
</compile_context>

<pallas_src>
import jax
import jax.numpy as jnp
from jax.experimental import pallas as pl
from jax.experimental.pallas import tpu as pltpu

_LANE = 128          # vreg lane width
_BF16_ROWS = 16      # bf16 packs 16 rows per sublane group -> min batch-tile granularity
_TM_CAP = 512        # measured ~85% of HBM roofline at 512-row tiles (v6e)


def _round_up(n, m):
    return ((n + m - 1) // m) * m


def _pad2d(a, rows, cols):
    r, c = a.shape
    return jnp.pad(a, ((0, rows - r), (0, cols - c)))


def _vmem_limit_bytes():
    """Generation-aware VMEM budget with ~15% headroom for compiler scratch."""
    try:
        cap = int(pltpu.get_tpu_info().vmem_capacity_bytes)
        cap = min(cap, 128 * 1024 * 1024)
    except Exception:
        cap = 56 * 1024 * 1024  # conservative (v7x has only 64 MiB per TensorCore)
    return int(cap * 0.85)


def mlp_kernel(x_ref, w1_ref, w2_ref, w3_ref, b_ref, o_ref):
    # Padded feature widths are static (taken from the block shapes).
    h_pad = w1_ref.shape[1]
    c_pad = w3_ref.shape[1]

    # Lane-aligned static slices of the packed f32 bias buffer.
    b1 = b_ref[:, 0:h_pad]                       # (1, H_pad) f32
    b2 = b_ref[:, h_pad:2 * h_pad]               # (1, H_pad) f32
    b3 = b_ref[:, 2 * h_pad:2 * h_pad + c_pad]   # (1, C_pad) f32

    # Layer 1: bf16 MXU matmul, f32 accumulate, f32 epilogue (bias + ReLU).
    h = jnp.dot(x_ref[...], w1_ref[...], preferred_element_type=jnp.float32)
    h = jnp.maximum(h + b1, 0.0)

    # Layer 2.
    h = jnp.dot(h.astype(w2_ref.dtype), w2_ref[...], preferred_element_type=jnp.float32)
    h = jnp.maximum(h + b2, 0.0)

    # Layer 3 (no activation, matches the PyTorch forward).
    o = jnp.dot(h.astype(w3_ref.dtype), w3_ref[...], preferred_element_type=jnp.float32)
    o_ref[...] = (o + b3).astype(o_ref.dtype)


def prepack_params(params):
    """One-time pad / bf16 cast / bias pack.  Do NOT redo this per forward call."""
    w1, b1, w2, b2, w3, b3 = params
    K, H = w1.shape
    C = w3.shape[1]
    K_pad = _round_up(K, _LANE)
    H_pad = _round_up(H, _LANE)
    C_pad = _round_up(C, _LANE)

    mxu_dtype = jnp.bfloat16
    w1_p = _pad2d(w1, K_pad, H_pad).astype(mxu_dtype)
    w2_p = _pad2d(w2, H_pad, H_pad).astype(mxu_dtype)
    w3_p = _pad2d(w3, H_pad, C_pad).astype(mxu_dtype)

    # Pack the three biases into one lane-aligned f32 buffer: [b1 | b2 | b3].
    bias = jnp.zeros((1, 2 * H_pad + C_pad), jnp.float32)
    bias = bias.at[0, 0:H].set(b1.reshape(-1).astype(jnp.float32))
    bias = bias.at[0, H_pad:H_pad + H].set(b2.reshape(-1).astype(jnp.float32))
    bias = bias.at[0, 2 * H_pad:2 * H_pad + C].set(b3.reshape(-1).astype(jnp.float32))

    return dict(w1=w1_p, w2=w2_p, w3=w3_p, bias=bias,
                dims=(K, H, C), padded=(K_pad, H_pad, C_pad))


def _choose_batch_tile(B, K_pad, H_pad, C_pad, vmem_budget):
    """Largest bf16-aligned batch tile (<=512 rows) that fits the VMEM budget."""
    weight_bytes = 2 * (K_pad * H_pad + H_pad * H_pad + H_pad * C_pad)  # bf16, 1-buffered
    bias_bytes = 4 * (2 * H_pad + C_pad)

    def est(tm):
        x_bytes = 2 * tm * K_pad * 2      # bf16, double-buffered
        out_bytes = 2 * tm * C_pad * 4    # f32, double-buffered
        act_bytes = 2 * tm * H_pad * 4    # f32 intermediates live in the body
        return weight_bytes + bias_bytes + x_bytes + out_bytes + act_bytes

    tm = min(_round_up(B, _BF16_ROWS), _TM_CAP)
    while tm > _BF16_ROWS and est(tm) > vmem_budget:
        tm = _round_up(tm // 2, _BF16_ROWS)

    # v7x has 2 TensorCores: if a single grid step would cover the whole batch, split it
    # so the "parallel" batch axis actually gives both cores work.
    b16 = _round_up(B, _BF16_ROWS)
    if b16 // tm <= 1 and tm >= 2 * _BF16_ROWS:
        tm = _round_up(tm // 2, _BF16_ROWS)

    b_pad = _round_up(B, tm)
    return tm, b_pad


def _build_call(TM, B_pad, K_pad, H_pad, C_pad, vmem_limit, single_buffer_weights):
    def resident_spec(shape):
        if single_buffer_weights:
            # Constant index_map -> loaded exactly once; no second pipeline buffer needed.
            return pl.BlockSpec(shape, lambda i: (0, 0), pipeline_mode=pl.Buffered(1))
        return pl.BlockSpec(shape, lambda i: (0, 0))

    return pl.pallas_call(
        mlp_kernel,
        out_shape=jax.ShapeDtypeStruct((B_pad, C_pad), jnp.float32),
        grid=(B_pad // TM,),
        in_specs=[
            pl.BlockSpec((TM, K_pad), lambda i: (i, 0)),       # x: batch-tiled, pipelined
            resident_spec((K_pad, H_pad)),                     # w1: resident
            resident_spec((H_pad, H_pad)),                     # w2: resident
            resident_spec((H_pad, C_pad)),                     # w3: resident
            resident_spec((1, 2 * H_pad + C_pad)),             # packed biases
        ],
        out_specs=pl.BlockSpec((TM, C_pad), lambda i: (i, 0)),  # lane-dense 128-wide store
        compiler_params=pltpu.CompilerParams(
            dimension_semantics=("parallel",),   # shard batch tiles across TCs on v7x
            vmem_limit_bytes=vmem_limit,
        ),
    )


def neural_net_forward(x, packed):
    K, H, C = packed["dims"]
    K_pad, H_pad, C_pad = packed["padded"]
    B, K_in = x.shape
    assert K_in == K, f"expected input_size={K}, got {K_in}"

    vmem_limit = _vmem_limit_bytes()
    TM, B_pad = _choose_batch_tile(B, K_pad, H_pad, C_pad, vmem_limit)

    x_p = _pad2d(x, B_pad, K_pad).astype(jnp.bfloat16)
    args = (x_p, packed["w1"], packed["w2"], packed["w3"], packed["bias"])

    try:
        out_padded = _build_call(TM, B_pad, K_pad, H_pad, C_pad, vmem_limit, True)(*args)
    except Exception:
        # Fallback for JAX versions where BlockSpec(pipeline_mode=pl.Buffered(1)) is not
        # supported: default double-buffering (correct, slightly more VMEM).
        out_padded = _build_call(TM, B_pad, K_pad, H_pad, C_pad, vmem_limit, False)(*args)

    # Strip the padding back off.
    return out_padded[:B, :C]


def init_params(key, input_size, hidden_size, num_classes):
    # Deterministic synthetic init (uniform like PyTorch's default Linear init).
    ks = jax.random.split(key, 6)

    def lin(kw, kb, fan_in, fan_out):
        bound = 1.0 / jnp.sqrt(float(fan_in))
        w = jax.random.uniform(kw, (fan_in, fan_out), jnp.float32, -bound, bound)
        b = jax.random.uniform(kb, (1, fan_out), jnp.float32, -bound, bound)
        return w, b

    w1, b1 = lin(ks[0], ks[1], input_size, hidden_size)
    w2, b2 = lin(ks[2], ks[3], hidden_size, hidden_size)
    w3, b3 = lin(ks[4], ks[5], hidden_size, num_classes)
    return (w1, b1, w2, b2, w3, b3)


if __name__ == "__main__":
    # Small shapes consistent with the module (bag-of-words -> hidden -> classes).
    B, INPUT_SIZE, HIDDEN_SIZE, NUM_CLASSES = 4, 64, 32, 8

    key = jax.random.PRNGKey(0)
    kx, kp = jax.random.split(key)
    x = jax.random.normal(kx, (B, INPUT_SIZE), dtype=jnp.float32)
    params = init_params(kp, INPUT_SIZE, HIDDEN_SIZE, NUM_CLASSES)

    packed = prepack_params(params)        # one-time weight prepack (pad + bf16 + bias pack)
    out = neural_net_forward(x, packed)
    jax.block_until_ready(out)
    assert out.shape == (B, NUM_CLASSES)

    # Pure-JAX reference using the same bf16-input / f32-accumulate precision as the kernel.
    w1, b1, w2, b2, w3, b3 = params
    bf = jnp.bfloat16
    h = jnp.dot(x.astype(bf), w1.astype(bf), preferred_element_type=jnp.float32) + b1
    h = jnp.maximum(h, 0.0)
    h = jnp.dot(h.astype(bf), w2.astype(bf), preferred_element_type=jnp.float32) + b2
    h = jnp.maximum(h, 0.0)
    ref = jnp.dot(h.astype(bf), w3.astype(bf), preferred_element_type=jnp.float32) + b3
    assert jnp.allclose(out, ref, atol=1e-2, rtol=1e-2), (
        f"max abs diff {jnp.max(jnp.abs(out - ref))}")

    # Looser sanity check against the full-f32 math of the original nn.Module.
    ref32 = jnp.maximum(x @ w1 + b1, 0.0)
    ref32 = jnp.maximum(ref32 @ w2 + b2, 0.0)
    ref32 = ref32 @ w3 + b3
    assert jnp.allclose(out, ref32, atol=5e-2, rtol=5e-2)

    print("KERNEL_OK")
</pallas_src>

<mosaic_0001>
module attributes {stable_mosaic.version = 11 : i64} {
  func.func @mlp_kernel(%arg0: i32, %arg1: memref<16x128xbf16, #tpu.memory_space<vmem>>, %arg2: memref<128x128xbf16, #tpu.memory_space<vmem>>, %arg3: memref<128x128xbf16, #tpu.memory_space<vmem>>, %arg4: memref<128x128xbf16, #tpu.memory_space<vmem>>, %arg5: memref<1x384xf32, #tpu.memory_space<vmem>>, %arg6: memref<16x128xf32, #tpu.memory_space<vmem>>) attributes {dimension_semantics = [#tpu.dimension_semantics<parallel>], iteration_bounds = array<i64: 1>, scalar_prefetch = 0 : i64, scratch_operands = 0 : i64, tpu.core_type = #tpu.core_type<tc>, window_params = [{transform_indices = @transform_0, window_bounds = array<i64: 16, 128>}, {pipeline_mode = #tpu.pipeline_mode<synchronous>, transform_indices = @transform_1, window_bounds = array<i64: 128, 128>}, {pipeline_mode = #tpu.pipeline_mode<synchronous>, transform_indices = @transform_2, window_bounds = array<i64: 128, 128>}, {pipeline_mode = #tpu.pipeline_mode<synchronous>, transform_indices = @transform_3, window_bounds = array<i64: 128, 128>}, {pipeline_mode = #tpu.pipeline_mode<synchronous>, transform_indices = @transform_4, window_bounds = array<i64: 1, 384>}, {transform_indices = @transform_5, window_bounds = array<i64: 16, 128>}]} {
    %c0 = arith.constant 0 : index
    %c0_0 = arith.constant 0 : index
    %0 = vector.load %arg5[%c0, %c0_0] : memref<1x384xf32, #tpu.memory_space<vmem>>, vector<1x128xf32>
    %c0_1 = arith.constant 0 : index
    %c128 = arith.constant 128 : index
    %1 = vector.load %arg5[%c0_1, %c128] : memref<1x384xf32, #tpu.memory_space<vmem>>, vector<1x128xf32>
    %c0_2 = arith.constant 0 : index
    %c256 = arith.constant 256 : index
    %2 = vector.load %arg5[%c0_2, %c256] : memref<1x384xf32, #tpu.memory_space<vmem>>, vector<1x128xf32>
    %c0_3 = arith.constant 0 : index
    %c0_4 = arith.constant 0 : index
    %3 = vector.load %arg1[%c0_3, %c0_4] : memref<16x128xbf16, #tpu.memory_space<vmem>>, vector<16x128xbf16>
    %c0_5 = arith.constant 0 : index
    %c0_6 = arith.constant 0 : index
    %4 = vector.load %arg2[%c0_5, %c0_6] : memref<128x128xbf16, #tpu.memory_space<vmem>>, vector<128x128xbf16>
    %cst = arith.constant dense<0.000000e+00> : vector<16x128xf32>
    %5 = tpu.matmul %3, %4, %cst {dimension_numbers = #tpu.dot_dimension_numbers<[1], [0], [0], [1], [0, 0, 1, 1], [], []>} : vector<16x128xbf16>, vector<128x128xbf16>, vector<16x128xf32> -> vector<16x128xf32>
    %6 = vector.broadcast %0 : vector<1x128xf32> to vector<16x128xf32>
    %7 = arith.addf %5, %6 : vector<16x128xf32>
    %cst_7 = arith.constant 0.000000e+00 : f32
    %8 = vector.broadcast %cst_7 : f32 to vector<16x128xf32>
    %9 = arith.maximumf %7, %8 : vector<16x128xf32>
    %10 = arith.truncf %9 : vector<16x128xf32> to vector<16x128xbf16>
    %c0_8 = arith.constant 0 : index
    %c0_9 = arith.constant 0 : index
    %11 = vector.load %arg3[%c0_8, %c0_9] : memref<128x128xbf16, #tpu.memory_space<vmem>>, vector<128x128xbf16>
    %cst_10 = arith.constant dense<0.000000e+00> : vector<16x128xf32>
    %12 = tpu.matmul %10, %11, %cst_10 {dimension_numbers = #tpu.dot_dimension_numbers<[1], [0], [0], [1], [0, 0, 1, 1], [], []>} : vector<16x128xbf16>, vector<128x128xbf16>, vector<16x128xf32> -> vector<16x128xf32>
    %13 = vector.broadcast %1 : vector<1x128xf32> to vector<16x128xf32>
    %14 = arith.addf %12, %13 : vector<16x128xf32>
    %cst_11 = arith.constant 0.000000e+00 : f32
    %15 = vector.broadcast %cst_11 : f32 to vector<16x128xf32>
    %16 = arith.maximumf %14, %15 : vector<16x128xf32>
    %17 = arith.truncf %16 : vector<16x128xf32> to vector<16x128xbf16>
    %c0_12 = arith.constant 0 : index
    %c0_13 = arith.constant 0 : index
    %18 = vector.load %arg4[%c0_12, %c0_13] : memref<128x128xbf16, #tpu.memory_space<vmem>>, vector<128x128xbf16>
    %cst_14 = arith.constant dense<0.000000e+00> : vector<16x128xf32>
    %19 = tpu.matmul %17, %18, %cst_14 {dimension_numbers = #tpu.dot_dimension_numbers<[1], [0], [0], [1], [0, 0, 1, 1], [], []>} : vector<16x128xbf16>, vector<128x128xbf16>, vector<16x128xf32> -> vector<16x128xf32>
    %20 = vector.broadcast %2 : vector<1x128xf32> to vector<16x128xf32>
    %21 = arith.addf %19, %20 : vector<16x128xf32>
    %c0_15 = arith.constant 0 : index
    %c0_16 = arith.constant 0 : index
    %22 = vector.load %arg6[%c0_15, %c0_16] : memref<16x128xf32, #tpu.memory_space<vmem>>, vector<16x128xf32>
    tpu.vector_store %arg6[%c0_15, %c0_16], %21 {strides = array<i32>} : memref<16x128xf32, #tpu.memory_space<vmem>>, vector<16x128xf32>,
    return
  }
  func.func @transform_0(%arg0: i32) -> (i32, i32) {
    %c0_i32 = arith.constant 0 : i32
    %c0_i32_0 = arith.constant 0 : i32
    return %arg0, %c0_i32 : i32, i32
  }
  func.func @transform_1(%arg0: i32) -> (i32, i32) {
    %c0_i32 = arith.constant 0 : i32
    %c0_i32_0 = arith.constant 0 : i32
    %c0_i32_1 = arith.constant 0 : i32
    return %c0_i32, %c0_i32_0 : i32, i32
  }
  func.func @transform_2(%arg0: i32) -> (i32, i32) {
    %c0_i32 = arith.constant 0 : i32
    %c0_i32_0 = arith.constant 0 : i32
    %c0_i32_1 = arith.constant 0 : i32
    return %c0_i32, %c0_i32_0 : i32, i32
  }
  func.func @transform_3(%arg0: i32) -> (i32, i32) {
    %c0_i32 = arith.constant 0 : i32
    %c0_i32_0 = arith.constant 0 : i32
    %c0_i32_1 = arith.constant 0 : i32
    return %c0_i32, %c0_i32_0 : i32, i32
  }
  func.func @transform_4(%arg0: i32) -> (i32, i32) {
    %c0_i32 = arith.constant 0 : i32
    %c0_i32_0 = arith.constant 0 : i32
    %c0_i32_1 = arith.constant 0 : i32
    return %c0_i32, %c0_i32_0 : i32, i32
  }
  func.func @transform_5(%arg0: i32) -> (i32, i32) {
    %c0_i32 = arith.constant 0 : i32
    %c0_i32_0 = arith.constant 0 : i32
    return %arg0, %c0_i32 : i32, i32
  }
}

module attributes {stable_mosaic.version = 11 : i64} {
  func.func @mlp_kernel(%arg0: i32, %arg1: memref<16x128xbf16, #tpu.memory_space<vmem>>, %arg2: memref<128x128xbf16, #tpu.memory_space<vmem>>, %arg3: memref<128x128xbf16, #tpu.memory_space<vmem>>, %arg4: memref<128x128xbf16, #tpu.memory_space<vmem>>, %arg5: memref<1x384xf32, #tpu.memory_space<vmem>>, %arg6: memref<16x128xf32, #tpu.memory_space<vmem>>) attributes {dimension_semantics = [#tpu.dimension_semantics<parallel>], iteration_bounds = array<i64: 1>, scalar_prefetch = 0 : i64, scratch_operands = 0 : i64, tpu.core_type = #tpu.core_type<tc>, window_params = [{transform_indices = @transform_0, window_bounds = array<i64: 16, 128>}, {pipeline_mode = #tpu.pipeline_mode<synchronous>, transform_indices = @transform_1, window_bounds = array<i64: 128, 128>}, {pipeline_mode = #tpu.pipeline_mode<synchronous>, transform_indices = @transform_2, window_bounds = array<i64: 128, 128>}, {pipeline_mode = #tpu.pipeline_mode<synchronous>, transform_indices = @transform_3, window_bounds = array<i64: 128, 128>}, {pipeline_mode = #tpu.pipeline_mode<synchronous>, transform_indices = @transform_4, window_bounds = array<i64: 1, 384>}, {transform_indices = @transform_5, window_bounds = array<i64: 16, 128>}]} {
    %c0 = arith.constant 0 : index
    %c0_0 = arith.constant 0 : index
    %0 = vector.load %arg5[%c0, %c0_0] : memref<1x384xf32, #tpu.memory_space<vmem>>, vector<1x128xf32>
    %c0_1 = arith.constant 0 : index
    %c128 = arith.constant 128 : index
    %1 = vector.load %arg5[%c0_1, %c128] : memref<1x384xf32, #tpu.memory_space<vmem>>, vector<1x128xf32>
    %c0_2 = arith.constant 0 : index
    %c256 = arith.constant 256 : index
    %2 = vector.load %arg5[%c0_2, %c256] : memref<1x384xf32, #tpu.memory_space<vmem>>, vector<1x128xf32>
    %c0_3 = arith.constant 0 : index
    %c0_4 = arith.constant 0 : index
    %3 = vector.load %arg1[%c0_3, %c0_4] : memref<16x128xbf16, #tpu.memory_space<vmem>>, vector<16x128xbf16>
    %c0_5 = arith.constant 0 : index
    %c0_6 = arith.constant 0 : index
    %4 = vector.load %arg2[%c0_5, %c0_6] : memref<128x128xbf16, #tpu.memory_space<vmem>>, vector<128x128xbf16>
    %cst = arith.constant dense<0.000000e+00> : vector<16x128xf32>
    %5 = tpu.matmul %3, %4, %cst {dimension_numbers = #tpu.dot_dimension_numbers<[1], [0], [0], [1], [0, 0, 1, 1], [], []>} : vector<16x128xbf16>, vector<128x128xbf16>, vector<16x128xf32> -> vector<16x128xf32>
    %6 = vector.broadcast %0 : vector<1x128xf32> to vector<16x128xf32>
    %7 = arith.addf %5, %6 : vector<16x128xf32>
    %cst_7 = arith.constant 0.000000e+00 : f32
    %8 = vector.broadcast %cst_7 : f32 to vector<16x128xf32>
    %9 = arith.maximumf %7, %8 : vector<16x128xf32>
    %10 = arith.truncf %9 : vector<16x128xf32> to vector<16x128xbf16>
    %c0_8 = arith.constant 0 : index
    %c0_9 = arith.constant 0 : index
    %11 = vector.load %arg3[%c0_8, %c0_9] : memref<128x128xbf16, #tpu.memory_space<vmem>>, vector<128x128xbf16>
    %cst_10 = arith.constant dense<0.000000e+00> : vector<16x128xf32>
    %12 = tpu.matmul %10, %11, %cst_10 {dimension_numbers = #tpu.dot_dimension_numbers<[1], [0], [0], [1], [0, 0, 1, 1], [], []>} : vector<16x128xbf16>, vector<128x128xbf16>, vector<16x128xf32> -> vector<16x128xf32>
    %13 = vector.broadcast %1 : vector<1x128xf32> to vector<16x128xf32>
    %14 = arith.addf %12, %13 : vector<16x128xf32>
    %cst_11 = arith.constant 0.000000e+00 : f32
    %15 = vector.broadcast %cst_11 : f32 to vector<16x128xf32>
    %16 = arith.maximumf %14, %15 : vector<16x128xf32>
    %17 = arith.truncf %16 : vector<16x128xf32> to vector<16x128xbf16>
    %c0_12 = arith.constant 0 : index
    %c0_13 = arith.constant 0 : index
    %18 = vector.load %arg4[%c0_12, %c0_13] : memref<128x128xbf16, #tpu.memory_space<vmem>>, vector<128x128xbf16>
    %cst_14 = arith.constant dense<0.000000e+00> : vector<16x128xf32>
    %19 = tpu.matmul %17, %18, %cst_14 {dimension_numbers = #tpu.dot_dimension_numbers<[1], [0], [0], [1], [0, 0, 1, 1], [], []>} : vector<16x128xbf16>, vector<128x128xbf16>, vector<16x128xf32> -> vector<16x128xf32>
    %20 = vector.broadcast %2 : vector<1x128xf32> to vector<16x128xf32>
    %21 = arith.addf %19, %20 : vector<16x128xf32>
    %c0_15 = arith.constant 0 : index
    %c0_16 = arith.constant 0 : index
    %22 = vector.load %arg6[%c0_15, %c0_16] : memref<16x128xf32, #tpu.memory_space<vmem>>, vector<16x128xf32>
    tpu.vector_store %arg6[%c0_15, %c0_16], %21 {strides = array<i32>} : memref<16x128xf32, #tpu.memory_space<vmem>>, vector<16x128xf32>,
    return
  }
  func.func @transform_0(%arg0: i32) -> (i32, i32) {
    %c0_i32 = arith.constant 0 : i32
    %c0_i32_0 = arith.constant 0 : i32
    return %arg0, %c0_i32 : i32, i32
  }
  func.func @transform_1(%arg0: i32) -> (i32, i32) {
    %c0_i32 = arith.constant 0 : i32
    %c0_i32_0 = arith.constant 0 : i32
    %c0_i32_1 = arith.constant 0 : i32
    return %c0_i32, %c0_i32_0 : i32, i32
  }
  func.func @transform_2(%arg0: i32) -> (i32, i32) {
    %c0_i32 = arith.constant 0 : i32
    %c0_i32_0 = arith.constant 0 : i32
    %c0_i32_1 = arith.constant 0 : i32
    return %c0_i32, %c0_i32_0 : i32, i32
  }
  func.func @transform_3(%arg0: i32) -> (i32, i32) {
    %c0_i32 = arith.constant 0 : i32
    %c0_i32_0 = arith.constant 0 : i32
    %c0_i32_1 = arith.constant 0 : i32
    return %c0_i32, %c0_i32_0 : i32, i32
  }
  func.func @transform_4(%arg0: i32) -> (i32, i32) {
    %c0_i32 = arith.constant 0 : i32
    %c0_i32_0 = arith.constant 0 : i32
    %c0_i32_1 = arith.constant 0 : i32
    return %c0_i32, %c0_i32_0 : i32, i32
  }
  func.func @transform_5(%arg0: i32) -> (i32, i32) {
    %c0_i32 = arith.constant 0 : i32
    %c0_i32_0 = arith.constant 0 : i32
    return %arg0, %c0_i32 : i32, i32
  }
}

</mosaic_0001>

<llo_original>
// kernel: tpu_custom_call.1
$region0: #{tpu_custom_call.1}
  #allocation0 [shape = 'u32[]', space=smem, size = 0x4, offset = 0x4, fixed_abs, tag = 'smem constant byte address 0x4 - core index']
  #allocation1 [shape = 'u32[144,128]{1,0:T(1,128)}', space=vmem, size = 0x12000, scoped, tag = 'internal scratch']
  %s0 = inlined_call_operand.hbm [shape: bf16[16,128], index: 0, kind: input, shape index: {}]
  %s1 = inlined_call_operand.hbm [shape: bf16[128,128], index: 1, kind: input, shape index: {}]
  %s2 = inlined_call_operand.hbm [shape: bf16[128,128], index: 2, kind: input, shape index: {}]
  %s3 = inlined_call_operand.hbm [shape: bf16[128,128], index: 3, kind: input, shape index: {}]
  %s4 = inlined_call_operand.vmem [shape: f32[1,384], index: 4, kind: input, shape index: {}]
  %s5 = inlined_call_operand.hbm [shape: f32[16,128], index: 5, kind: output, shape index: {}]
  %s6 = sld [smem:[#allocation0]]
  $region46: #{tpu_custom_call.1} parent=0
    _
  %s8 = ssub.s32 1, %s6
  %s9 = scalar_select 0, %s8, %s6
  $region1: #{tpu_custom_call.1} parent=0
    #allocation2 [shape = 'u8[4096]{0}', space=vmem, size = 0x1000, scoped, tag = 'input window, operand 0, single buffered']
    #allocation3 [shape = 's32[1]{0}', space=sflag, size = 0x4, scoped, tag = 'scoped memory for tpu_custom_call.1']
    #allocation4 [shape = 's32[1]{0}', space=sflag, size = 0x4, scoped, tag = 'scoped memory for tpu_custom_call.1']
    #allocation5 [shape = 'u8[32768]{0}', space=vmem, size = 0x8000, scoped, tag = 'input window, operand 1, single buffered']
    #allocation6 [shape = 's32[1]{0}', space=sflag, size = 0x4, scoped, tag = 'scoped memory for tpu_custom_call.1']
    #allocation7 [shape = 'u8[32768]{0}', space=vmem, size = 0x8000, scoped, tag = 'input window, operand 2, single buffered']
    #allocation8 [shape = 'u8[32768]{0}', space=vmem, size = 0x8000, scoped, tag = 'input window, operand 3, single buffered']
    #allocation9 [shape = 's32[1]{0}', space=sflag, size = 0x4, scoped, tag = 'scoped memory for tpu_custom_call.1']
    #allocation10 [shape = 'u8[8192]{0}', space=vmem, size = 0x2000, scoped, tag = 'output window, operand 0, single buffered']
    %10 = vsyncpa [#allocation3], 0
    %11 = vsyncpa [#allocation6], 0
    %12 = vsyncpa [#allocation9], 0
    %13 = vsyncpa [#allocation4], 0
    // Predicated region
    $region2: #{tpu_custom_call.1} parent=1 // pred_check
      _
    $region3: #{tpu_custom_call.1} parent=1 // pred_check_branch
      %15 = sbr.rel (0) target = $region5
    $region4: #{tpu_custom_call.1} parent=1 // pred_region
      %s17 = ssub.s32 128, 128
      %18 = vsyncadd [#allocation3], %s17
      %s19 = sshll.u32 [#allocation2], 4
      %s20 = int_to_ptr.vmem [resolvable:$true] %s19
      %25 = dma.hbm_to_vmem [thread:$0]  %s0, 128, %s20, [#allocation3], 64, 64, 4
    $region5: #{tpu_custom_call.1} parent=1 // pred_fallthru
      _
    // Predicated region
    $region6: #{tpu_custom_call.1} parent=1 // pred_check
      _
    $region7: #{tpu_custom_call.1} parent=1 // pred_check_branch
      %27 = sbr.rel (0) target = $region9
    $region8: #{tpu_custom_call.1} parent=1 // pred_region
      %s29 = ssub.s32 1024, 1024
      %30 = vsyncadd [#allocation6], %s29
      %s31 = sshll.u32 [#allocation5], 4
      %s32 = int_to_ptr.vmem [resolvable:$true] %s31
      %37 = dma.hbm_to_vmem [thread:$0]  %s1, 1024, %s32, [#allocation6], 64, 64, 4
    $region9: #{tpu_custom_call.1} parent=1 // pred_fallthru
      _
    // Predicated region
    $region10: #{tpu_custom_call.1} parent=1 // pred_check
      _
    $region11: #{tpu_custom_call.1} parent=1 // pred_check_branch
      %39 = sbr.rel (0) target = $region13
    $region12: #{tpu_custom_call.1} parent=1 // pred_region
      %s41 = ssub.s32 1024, 1024
      %42 = vsyncadd [#allocation6], %s41
      %s43 = sshll.u32 [#allocation7], 4
      %s44 = int_to_ptr.vmem [resolvable:$true] %s43
      %49 = dma.hbm_to_vmem [thread:$0]  %s2, 1024, %s44, [#allocation6], 64, 64, 4
    $region13: #{tpu_custom_call.1} parent=1 // pred_fallthru
      _
    // Predicated region
    $region14: #{tpu_custom_call.1} parent=1 // pred_check
      _
    $region15: #{tpu_custom_call.1} parent=1 // pred_check_branch
      %51 = sbr.rel (0) target = $region17
    $region16: #{tpu_custom_call.1} parent=1 // pred_region
      %s53 = ssub.s32 1024, 1024
      %54 = vsyncadd [#allocation9], %s53
      %s55 = sshll.u32 [#allocation8], 4
      %s56 = int_to_ptr.vmem [resolvable:$true] %s55
      %61 = dma.hbm_to_vmem [thread:$0]  %s3, 1024, %s56, [#allocation9], 64, 64, 4
    $region17: #{tpu_custom_call.1} parent=1 // pred_fallthru
      _
    // Predicated region
    $region18: #{tpu_custom_call.1} parent=1 // pred_check
      _
    $region19: #{tpu_custom_call.1} parent=1 // pred_check_branch
      %63 = sbr.rel (0) target = $region21
    $region20: #{tpu_custom_call.1} parent=1 // pred_region
      _
    $region21: #{tpu_custom_call.1} parent=1 // pred_fallthru
      _
    // Predicated region
    $region22: #{tpu_custom_call.1} parent=1 // pred_check
      _
    $region23: #{tpu_custom_call.1} parent=1 // pred_check_branch
      %65 = sbr.rel (0) target = $region25
    $region24: #{tpu_custom_call.1} parent=1 // pred_region
      %66 = dma.done [#allocation3], 128
    $region25: #{tpu_custom_call.1} parent=1 // pred_fallthru
      _
    // Predicated region
    $region26: #{tpu_custom_call.1} parent=1 // pred_check
      _
    $region27: #{tpu_custom_call.1} parent=1 // pred_check_branch
      %68 = sbr.rel (0) target = $region29
    $region28: #{tpu_custom_call.1} parent=1 // pred_region
      %69 = dma.done [#allocation6], 1024
    $region29: #{tpu_custom_call.1} parent=1 // pred_fallthru
      _
    // Predicated region
    $region30: #{tpu_custom_call.1} parent=1 // pred_check
      _
    $region31: #{tpu_custom_call.1} parent=1 // pred_check_branch
      %71 = sbr.rel (0) target = $region33
    $region32: #{tpu_custom_call.1} parent=1 // pred_region
      %72 = dma.done [#allocation6], 1024
    $region33: #{tpu_custom_call.1} parent=1 // pred_fallthru
      _
    // Predicated region
    $region34: #{tpu_custom_call.1} parent=1 // pred_check
      _
    $region35: #{tpu_custom_call.1} parent=1 // pred_check_branch
      %74 = sbr.rel (0) target = $region37
    $region36: #{tpu_custom_call.1} parent=1 // pred_region
      %75 = dma.done [#allocation9], 1024
    $region37: #{tpu_custom_call.1} parent=1 // pred_fallthru
      _
    %v77 = vld [vmem:[%s4] sm:$0x1]
    %v78 = vld [vmem:[%s4 + $0x1] sm:$0x1]
    %v79 = vld [vmem:[%s4 + $0x2] sm:$0x1]
    %v80 = vld [vmem:[#allocation2] sm:$0xf]
    %v81 = vld [vmem:[#allocation2 + $0x4] sm:$0xf]
    %v82 = vld [vmem:[#allocation5] sm:$0xf]
    %v83 = vld [vmem:[#allocation5 + $0x4] sm:$0xf]
    %v84 = vld [vmem:[#allocation5 + $0x8] sm:$0xf]
    %v85 = vld [vmem:[#allocation5 + $0xc] sm:$0xf]
    %v86 = vld [vmem:[#allocation5 + $0x10] sm:$0xf]
    %v87 = vld [vmem:[#allocation5 + $0x14] sm:$0xf]
    %v88 = vld [vmem:[#allocation5 + $0x18] sm:$0xf]
    %v89 = vld [vmem:[#allocation5 + $0x1c] sm:$0xf]
    %v90 = vld [vmem:[#allocation5 + $0x20] sm:$0xf]
    %v91 = vld [vmem:[#allocation5 + $0x24] sm:$0xf]
    %v92 = vld [vmem:[#allocation5 + $0x28] sm:$0xf]
    %v93 = vld [vmem:[#allocation5 + $0x2c] sm:$0xf]
    %v94 = vld [vmem:[#allocation5 + $0x30] sm:$0xf]
    %v95 = vld [vmem:[#allocation5 + $0x34] sm:$0xf]
    %v96 = vld [vmem:[#allocation5 + $0x38] sm:$0xf]
    %v97 = vld [vmem:[#allocation5 + $0x3c] sm:$0xf]
    %v99 = vlaneseq
    %v100 = vshrl.u32 %v99, 7
    %v101 = vsub.s32 0, %v100
    %v102 = vrot.slane %v77, %v101
    %v106 = vunpack.c.l.b16 %v80
    %v107 = vunpack.c.l.b16 %v81
    %v108 = vpack.c.b16 %v107, %v106
    %v126 = vunpack.c.l.b16 %v82
    %v127 = vunpack.c.l.b16 %v83
    %v128 = vunpack.c.l.b16 %v84
    %v129 = vunpack.c.l.b16 %v85
    %v130 = vunpack.c.l.b16 %v86
    %v131 = vunpack.c.l.b16 %v87
    %v132 = vunpack.c.l.b16 %v88
    %v133 = vunpack.c.l.b16 %v89
    %v134 = vunpack.c.l.b16 %v90
    %v135 = vunpack.c.l.b16 %v91
    %v136 = vunpack.c.l.b16 %v92
    %v137 = vunpack.c.l.b16 %v93
    %v138 = vunpack.c.l.b16 %v94
    %v139 = vunpack.c.l.b16 %v95
    %v140 = vunpack.c.l.b16 %v96
    %v141 = vunpack.c.l.b16 %v97
    %v142 = vpack.c.b16 %v127, %v126
    %v143 = vpack.c.b16 %v129, %v128
    %v144 = vpack.c.b16 %v131, %v130
    %v145 = vpack.c.b16 %v133, %v132
    %v146 = vpack.c.b16 %v135, %v134
    %v147 = vpack.c.b16 %v137, %v136
    %v148 = vpack.c.b16 %v139, %v138
    %v149 = vpack.c.b16 %v141, %v140
    %158 = vmatprep.subr.bf16.mxu0 0
    %159 = vmatpush1.bf16.msra.mxu0 %v142
    %160 = vmatprep.subr.bf16.mxu0 0
    %161 = vmatpush1.bf16.msra.mxu0 %v143
    %162 = vmatprep.subr.bf16.mxu0 0
    %163 = vmatpush1.bf16.msra.mxu0 %v144
    %164 = vmatprep.subr.bf16.mxu0 0
    %165 = vmatpush1.bf16.msra.mxu0 %v145
    %166 = vmatprep.subr.bf16.mxu0 0
    %167 = vmatpush1.bf16.msra.mxu0 %v146
    %168 = vmatprep.subr.bf16.mxu0 0
    %169 = vmatpush1.bf16.msra.mxu0 %v147
    %170 = vmatprep.subr.bf16.mxu0 0
    %171 = vmatpush1.bf16.msra.mxu0 %v148
    %172 = vmatprep.subr.bf16.mxu0 0
    %173 = vmatpush1.bf16.msra.mxu0 %v149
    %174 = vmatprep.subr.bf16.mxu0 0
    %175 = vmatpush1.bf16.msra.mxu0 0
    %176 = vmatprep.subr.bf16.mxu0 0
    %177 = vmatpush1.bf16.msra.mxu0 0
    %178 = vmatprep.subr.bf16.mxu0 0
    %179 = vmatpush1.bf16.msra.mxu0 0
    %180 = vmatprep.subr.bf16.mxu0 0
    %181 = vmatpush1.bf16.msra.mxu0 0
    %182 = vmatprep.subr.bf16.mxu0 0
    %183 = vmatpush1.bf16.msra.mxu0 0
    %184 = vmatprep.subr.bf16.mxu0 0
    %185 = vmatpush1.bf16.msra.mxu0 0
    %186 = vmatprep.subr.bf16.mxu0 0
    %187 = vmatpush1.bf16.msra.mxu0 0
    %188 = vmatprep.subr.bf16.mxu0 0
    %189 = vmatpush1.bf16.msra.mxu0 0
    %190 = vmatprep.mubr.bf16.mxu0 0
    %191 = vmatmul.mubr.bf16.gmra.mrb[0].mxu0 %v108
    %v192 = vpop.f32.mrb[0].mxu0
    %v193 = vadd.f32 %v102, %v192
    %v194 = vpop.f32.mrb[0].mxu0
    %v195 = vpop.f32.mrb[0].mxu0
    %v196 = vadd.f32 %v102, %v195
    %v197 = vpop.f32.mrb[0].mxu0
    %198 = vdwg.mxu0
    %v199 = vmax.f32 %v193, 0.0
    %v200 = vmax.f32 %v196, 0.0
    %v201 = vpack.c.bf16 %v200, %v199
    %v202 = vld [vmem:[#allocation7] sm:$0xf]
    %v203 = vld [vmem:[#allocation7 + $0x4] sm:$0xf]
    %v204 = vld [vmem:[#allocation7 + $0x8] sm:$0xf]
    %v205 = vld [vmem:[#allocation7 + $0xc] sm:$0xf]
    %v206 = vld [vmem:[#allocation7 + $0x10] sm:$0xf]
    %v207 = vld [vmem:[#allocation7 + $0x14] sm:$0xf]
    %v208 = vld [vmem:[#allocation7 + $0x18] sm:$0xf]
    %v209 = vld [vmem:[#allocation7 + $0x1c] sm:$0xf]
    %v210 = vld [vmem:[#allocation7 + $0x20] sm:$0xf]
    %v211 = vld [vmem:[#allocation7 + $0x24] sm:$0xf]
    %v212 = vld [vmem:[#allocation7 + $0x28] sm:$0xf]
    %v213 = vld [vmem:[#allocation7 + $0x2c] sm:$0xf]
    %v214 = vld [vmem:[#allocation7 + $0x30] sm:$0xf]
    %v215 = vld [vmem:[#allocation7 + $0x34] sm:$0xf]
    %v216 = vld [vmem:[#allocation7 + $0x38] sm:$0xf]
    %v217 = vld [vmem:[#allocation7 + $0x3c] sm:$0xf]
    %v219 = vlaneseq
    %v220 = vshrl.u32 %v219, 7
    %v221 = vsub.s32 0, %v220
    %v222 = vrot.slane %v78, %v221
    %v240 = vunpack.c.l.b16 %v202
    %v241 = vunpack.c.l.b16 %v203
    %v242 = vunpack.c.l.b16 %v204
    %v243 = vunpack.c.l.b16 %v205
    %v244 = vunpack.c.l.b16 %v206
    %v245 = vunpack.c.l.b16 %v207
    %v246 = vunpack.c.l.b16 %v208
    %v247 = vunpack.c.l.b16 %v209
    %v248 = vunpack.c.l.b16 %v210
    %v249 = vunpack.c.l.b16 %v211
    %v250 = vunpack.c.l.b16 %v212
    %v251 = vunpack.c.l.b16 %v213
    %v252 = vunpack.c.l.b16 %v214
    %v253 = vunpack.c.l.b16 %v215
    %v254 = vunpack.c.l.b16 %v216
    %v255 = vunpack.c.l.b16 %v217
    %v256 = vpack.c.b16 %v241, %v240
    %v257 = vpack.c.b16 %v243, %v242
    %v258 = vpack.c.b16 %v245, %v244
    %v259 = vpack.c.b16 %v247, %v246
    %v260 = vpack.c.b16 %v249, %v248
    %v261 = vpack.c.b16 %v251, %v250
    %v262 = vpack.c.b16 %v253, %v252
    %v263 = vpack.c.b16 %v255, %v254
    %272 = vmatprep.subr.bf16.mxu0 0
    %273 = vmatpush1.bf16.msra.mxu0 %v256
    %274 = vmatprep.subr.bf16.mxu0 0
    %275 = vmatpush1.bf16.msra.mxu0 %v257
    %276 = vmatprep.subr.bf16.mxu0 0
    %277 = vmatpush1.bf16.msra.mxu0 %v258
    %278 = vmatprep.subr.bf16.mxu0 0
    %279 = vmatpush1.bf16.msra.mxu0 %v259
    %280 = vmatprep.subr.bf16.mxu0 0
    %281 = vmatpush1.bf16.msra.mxu0 %v260
    %282 = vmatprep.subr.bf16.mxu0 0
    %283 = vmatpush1.bf16.msra.mxu0 %v261
    %284 = vmatprep.subr.bf16.mxu0 0
    %285 = vmatpush1.bf16.msra.mxu0 %v262
    %286 = vmatprep.subr.bf16.mxu0 0
    %287 = vmatpush1.bf16.msra.mxu0 %v263
    %288 = vmatprep.subr.bf16.mxu0 0
    %289 = vmatpush1.bf16.msra.mxu0 0
    %290 = vmatprep.subr.bf16.mxu0 0
    %291 = vmatpush1.bf16.msra.mxu0 0
    %292 = vmatprep.subr.bf16.mxu0 0
    %293 = vmatpush1.bf16.msra.mxu0 0
    %294 = vmatprep.subr.bf16.mxu0 0
    %295 = vmatpush1.bf16.msra.mxu0 0
    %296 = vmatprep.subr.bf16.mxu0 0
    %297 = vmatpush1.bf16.msra.mxu0 0
    %298 = vmatprep.subr.bf16.mxu0 0
    %299 = vmatpush1.bf16.msra.mxu0 0
    %300 = vmatprep.subr.bf16.mxu0 0
    %301 = vmatpush1.bf16.msra.mxu0 0
    %302 = vmatprep.subr.bf16.mxu0 0
    %303 = vmatpush1.bf16.msra.mxu0 0
    %304 = vmatprep.mubr.bf16.mxu0 0
    %305 = vmatmul.mubr.bf16.gmra.mrb[0].mxu0 %v201
    %v306 = vpop.f32.mrb[0].mxu0
    %v307 = vadd.f32 %v222, %v306
    %v308 = vpop.f32.mrb[0].mxu0
    %v309 = vpop.f32.mrb[0].mxu0
    %v310 = vadd.f32 %v222, %v309
    %v311 = vpop.f32.mrb[0].mxu0
    %312 = vdwg.mxu0
    %v313 = vmax.f32 %v307, 0.0
    %v314 = vmax.f32 %v310, 0.0
    %v315 = vpack.c.bf16 %v314, %v313
    %v316 = vld [vmem:[#allocation8] sm:$0xf]
    %v317 = vld [vmem:[#allocation8 + $0x4] sm:$0xf]
    %v318 = vld [vmem:[#allocation8 + $0x8] sm:$0xf]
    %v319 = vld [vmem:[#allocation8 + $0xc] sm:$0xf]
    %v320 = vld [vmem:[#allocation8 + $0x10] sm:$0xf]
    %v321 = vld [vmem:[#allocation8 + $0x14] sm:$0xf]
    %v322 = vld [vmem:[#allocation8 + $0x18] sm:$0xf]
    %v323 = vld [vmem:[#allocation8 + $0x1c] sm:$0xf]
    %v324 = vld [vmem:[#allocation8 + $0x20] sm:$0xf]
    %v325 = vld [vmem:[#allocation8 + $0x24] sm:$0xf]
    %v326 = vld [vmem:[#allocation8 + $0x28] sm:$0xf]
    %v327 = vld [vmem:[#allocation8 + $0x2c] sm:$0xf]
    %v328 = vld [vmem:[#allocation8 + $0x30] sm:$0xf]
    %v329 = vld [vmem:[#allocation8 + $0x34] sm:$0xf]
    %v330 = vld [vmem:[#allocation8 + $0x38] sm:$0xf]
    %v331 = vld [vmem:[#allocation8 + $0x3c] sm:$0xf]
    %v333 = vlaneseq
    %v334 = vshrl.u32 %v333, 7
    %v335 = vsub.s32 0, %v334
    %v336 = vrot.slane %v79, %v335
    %v354 = vunpack.c.l.b16 %v316
    %v355 = vunpack.c.l.b16 %v317
    %v356 = vunpack.c.l.b16 %v318
    %v357 = vunpack.c.l.b16 %v319
    %v358 = vunpack.c.l.b16 %v320
    %v359 = vunpack.c.l.b16 %v321
    %v360 = vunpack.c.l.b16 %v322
    %v361 = vunpack.c.l.b16 %v323
    %v362 = vunpack.c.l.b16 %v324
    %v363 = vunpack.c.l.b16 %v325
    %v364 = vunpack.c.l.b16 %v326
    %v365 = vunpack.c.l.b16 %v327
    %v366 = vunpack.c.l.b16 %v328
    %v367 = vunpack.c.l.b16 %v329
    %v368 = vunpack.c.l.b16 %v330
    %v369 = vunpack.c.l.b16 %v331
    %v370 = vpack.c.b16 %v355, %v354
    %v371 = vpack.c.b16 %v357, %v356
    %v372 = vpack.c.b16 %v359, %v358
    %v373 = vpack.c.b16 %v361, %v360
    %v374 = vpack.c.b16 %v363, %v362
    %v375 = vpack.c.b16 %v365, %v364
    %v376 = vpack.c.b16 %v367, %v366
    %v377 = vpack.c.b16 %v369, %v368
    %386 = vmatprep.subr.bf16.mxu0 0
    %387 = vmatpush1.bf16.msra.mxu0 %v370
    %388 = vmatprep.subr.bf16.mxu0 0
    %389 = vmatpush1.bf16.msra.mxu0 %v371
    %390 = vmatprep.subr.bf16.mxu0 0
    %391 = vmatpush1.bf16.msra.mxu0 %v372
    %392 = vmatprep.subr.bf16.mxu0 0
    %393 = vmatpush1.bf16.msra.mxu0 %v373
    %394 = vmatprep.subr.bf16.mxu0 0
    %395 = vmatpush1.bf16.msra.mxu0 %v374
    %396 = vmatprep.subr.bf16.mxu0 0
    %397 = vmatpush1.bf16.msra.mxu0 %v375
    %398 = vmatprep.subr.bf16.mxu0 0
    %399 = vmatpush1.bf16.msra.mxu0 %v376
    %400 = vmatprep.subr.bf16.mxu0 0
    %401 = vmatpush1.bf16.msra.mxu0 %v377
    %402 = vmatprep.subr.bf16.mxu0 0
    %403 = vmatpush1.bf16.msra.mxu0 0
    %404 = vmatprep.subr.bf16.mxu0 0
    %405 = vmatpush1.bf16.msra.mxu0 0
    %406 = vmatprep.subr.bf16.mxu0 0
    %407 = vmatpush1.bf16.msra.mxu0 0
    %408 = vmatprep.subr.bf16.mxu0 0
    %409 = vmatpush1.bf16.msra.mxu0 0
    %410 = vmatprep.subr.bf16.mxu0 0
    %411 = vmatpush1.bf16.msra.mxu0 0
    %412 = vmatprep.subr.bf16.mxu0 0
    %413 = vmatpush1.bf16.msra.mxu0 0
    %414 = vmatprep.subr.bf16.mxu0 0
    %415 = vmatpush1.bf16.msra.mxu0 0
    %416 = vmatprep.subr.bf16.mxu0 0
    %417 = vmatpush1.bf16.msra.mxu0 0
    %418 = vmatprep.mubr.bf16.mxu0 0
    %419 = vmatmul.mubr.bf16.gmra.mrb[0].mxu0 %v315
    %v420 = vpop.f32.mrb[0].mxu0
    %v421 = vadd.f32 %v336, %v420
    %v422 = vpop.f32.mrb[0].mxu0
    %v423 = vpop.f32.mrb[0].mxu0
    %v424 = vadd.f32 %v336, %v423
    %v425 = vpop.f32.mrb[0].mxu0
    %426 = vdwg.mxu0
    %427 = vst [vmem:[#allocation10] sm:$0xff] %v421
    %428 = vst [vmem:[#allocation10 + $0x8] sm:$0xff] %v424
    // Predicated region
    $region38: #{tpu_custom_call.1} parent=1 // pred_check
      _
    $region39: #{tpu_custom_call.1} parent=1 // pred_check_branch
      %430 = sbr.rel (0) target = $region41
    $region40: #{tpu_custom_call.1} parent=1 // pred_region
      %s432 = ssub.s32 256, 256
      %433 = vsyncadd [#allocation4], %s432
      %s434 = sshll.u32 [#allocation10], 4
      %s435 = int_to_ptr.vmem [resolvable:$true] %s434
      %440 = dma.vmem_to_hbm [thread:$0]  %s435, 256, %s5, [#allocation4], 128, 128, 8
    $region41: #{tpu_custom_call.1} parent=1 // pred_fallthru
      _
    // Predicated region
    $region42: #{tpu_custom_call.1} parent=1 // pred_check
      _
    $region43: #{tpu_custom_call.1} parent=1 // pred_check_branch
      %442 = sbr.rel (0) target = $region45
    $region44: #{tpu_custom_call.1} parent=1 // pred_region
      %443 = dma.done [#allocation4], 256
    $region45: #{tpu_custom_call.1} parent=1 // pred_fallthru
      _
    %444 = vsyncpa [#allocation3], 1
    %445 = vsyncpa [#allocation6], 1
    %446 = vsyncpa [#allocation9], 1
    %447 = vsyncpa [#allocation4], 1

// kernel: tpu_custom_call.1
$region0: #{tpu_custom_call.1}
  #allocation0 [shape = 'u32[]', space=smem, size = 0x4, offset = 0x4, fixed_abs, tag = 'smem constant byte address 0x4 - core index']
  #allocation1 [shape = 'u32[144,128]{1,0:T(1,128)}', space=vmem, size = 0x12000, scoped, tag = 'internal scratch']
  %s0 = inlined_call_operand.hbm [shape: bf16[16,128], index: 0, kind: input, shape index: {}]
  %s1 = inlined_call_operand.hbm [shape: bf16[128,128], index: 1, kind: input, shape index: {}]
  %s2 = inlined_call_operand.hbm [shape: bf16[128,128], index: 2, kind: input, shape index: {}]
  %s3 = inlined_call_operand.hbm [shape: bf16[128,128], index: 3, kind: input, shape index: {}]
  %s4 = inlined_call_operand.vmem [shape: f32[1,384], index: 4, kind: input, shape index: {}]
  %s5 = inlined_call_operand.hbm [shape: f32[16,128], index: 5, kind: output, shape index: {}]
  %s6 = sld [smem:[#allocation0]]
  $region46: #{tpu_custom_call.1} parent=0
    _
  %s8 = ssub.s32 1, %s6
  %s9 = scalar_select 0, %s8, %s6
  $region1: #{tpu_custom_call.1} parent=0
    #allocation2 [shape = 'u8[4096]{0}', space=vmem, size = 0x1000, scoped, tag = 'input window, operand 0, single buffered']
    #allocation3 [shape = 's32[1]{0}', space=sflag, size = 0x4, scoped, tag = 'scoped memory for tpu_custom_call.1']
    #allocation4 [shape = 's32[1]{0}', space=sflag, size = 0x4, scoped, tag = 'scoped memory for tpu_custom_call.1']
    #allocation5 [shape = 'u8[32768]{0}', space=vmem, size = 0x8000, scoped, tag = 'input window, operand 1, single buffered']
    #allocation6 [shape = 's32[1]{0}', space=sflag, size = 0x4, scoped, tag = 'scoped memory for tpu_custom_call.1']
    #allocation7 [shape = 'u8[32768]{0}', space=vmem, size = 0x8000, scoped, tag = 'input window, operand 2, single buffered']
    #allocation8 [shape = 'u8[32768]{0}', space=vmem, size = 0x8000, scoped, tag = 'input window, operand 3, single buffered']
    #allocation9 [shape = 's32[1]{0}', space=sflag, size = 0x4, scoped, tag = 'scoped memory for tpu_custom_call.1']
    #allocation10 [shape = 'u8[8192]{0}', space=vmem, size = 0x2000, scoped, tag = 'output window, operand 0, single buffered']
    %10 = vsyncpa [#allocation3], 0
    %11 = vsyncpa [#allocation6], 0
    %12 = vsyncpa [#allocation9], 0
    %13 = vsyncpa [#allocation4], 0
    // Predicated region
    $region2: #{tpu_custom_call.1} parent=1 // pred_check
      _
    $region3: #{tpu_custom_call.1} parent=1 // pred_check_branch
      %15 = sbr.rel (0) target = $region5
    $region4: #{tpu_custom_call.1} parent=1 // pred_region
      %s17 = ssub.s32 128, 128
      %18 = vsyncadd [#allocation3], %s17
      %s19 = sshll.u32 [#allocation2], 4
      %s20 = int_to_ptr.vmem [resolvable:$true] %s19
      %25 = dma.hbm_to_vmem [thread:$0]  %s0, 128, %s20, [#allocation3], 64, 64, 4
    $region5: #{tpu_custom_call.1} parent=1 // pred_fallthru
      _
    // Predicated region
    $region6: #{tpu_custom_call.1} parent=1 // pred_check
      _
    $region7: #{tpu_custom_call.1} parent=1 // pred_check_branch
      %27 = sbr.rel (0) target = $region9
    $region8: #{tpu_custom_call.1} parent=1 // pred_region
      %s29 = ssub.s32 1024, 1024
      %30 = vsyncadd [#allocation6], %s29
      %s31 = sshll.u32 [#allocation5], 4
      %s32 = int_to_ptr.vmem [resolvable:$true] %s31
      %37 = dma.hbm_to_vmem [thread:$0]  %s1, 1024, %s32, [#allocation6], 64, 64, 4
    $region9: #{tpu_custom_call.1} parent=1 // pred_fallthru
      _
    // Predicated region
    $region10: #{tpu_custom_call.1} parent=1 // pred_check
      _
    $region11: #{tpu_custom_call.1} parent=1 // pred_check_branch
      %39 = sbr.rel (0) target = $region13
    $region12: #{tpu_custom_call.1} parent=1 // pred_region
      %s41 = ssub.s32 1024, 1024
      %42 = vsyncadd [#allocation6], %s41
      %s43 = sshll.u32 [#allocation7], 4
      %s44 = int_to_ptr.vmem [resolvable:$true] %s43
      %49 = dma.hbm_to_vmem [thread:$0]  %s2, 1024, %s44, [#allocation6], 64, 64, 4
    $region13: #{tpu_custom_call.1} parent=1 // pred_fallthru
      _
    // Predicated region
    $region14: #{tpu_custom_call.1} parent=1 // pred_check
      _
    $region15: #{tpu_custom_call.1} parent=1 // pred_check_branch
      %51 = sbr.rel (0) target = $region17
    $region16: #{tpu_custom_call.1} parent=1 // pred_region
      %s53 = ssub.s32 1024, 1024
      %54 = vsyncadd [#allocation9], %s53
      %s55 = sshll.u32 [#allocation8], 4
      %s56 = int_to_ptr.vmem [resolvable:$true] %s55
      %61 = dma.hbm_to_vmem [thread:$0]  %s3, 1024, %s56, [#allocation9], 64, 64, 4
    $region17: #{tpu_custom_call.1} parent=1 // pred_fallthru
      _
    // Predicated region
    $region18: #{tpu_custom_call.1} parent=1 // pred_check
      _
    $region19: #{tpu_custom_call.1} parent=1 // pred_check_branch
      %63 = sbr.rel (0) target = $region21
    $region20: #{tpu_custom_call.1} parent=1 // pred_region
      _
    $region21: #{tpu_custom_call.1} parent=1 // pred_fallthru
      _
    // Predicated region
    $region22: #{tpu_custom_call.1} parent=1 // pred_check
      _
    $region23: #{tpu_custom_call.1} parent=1 // pred_check_branch
      %65 = sbr.rel (0) target = $region25
    $region24: #{tpu_custom_call.1} parent=1 // pred_region
      %66 = dma.done [#allocation3], 128
    $region25: #{tpu_custom_call.1} parent=1 // pred_fallthru
      _
    // Predicated region
    $region26: #{tpu_custom_call.1} parent=1 // pred_check
      _
    $region27: #{tpu_custom_call.1} parent=1 // pred_check_branch
      %68 = sbr.rel (0) target = $region29
    $region28: #{tpu_custom_call.1} parent=1 // pred_region
      %69 = dma.done [#allocation6], 1024
    $region29: #{tpu_custom_call.1} parent=1 // pred_fallthru
      _
    // Predicated region
    $region30: #{tpu_custom_call.1} parent=1 // pred_check
      _
    $region31: #{tpu_custom_call.1} parent=1 // pred_check_branch
      %71 = sbr.rel (0) target = $region33
    $region32: #{tpu_custom_call.1} parent=1 // pred_region
      %72 = dma.done [#allocation6], 1024
    $region33: #{tpu_custom_call.1} parent=1 // pred_fallthru
      _
    // Predicated region
    $region34: #{tpu_custom_call.1} parent=1 // pred_check
      _
    $region35: #{tpu_custom_call.1} parent=1 // pred_check_branch
      %74 = sbr.rel (0) target = $region37
    $region36: #{tpu_custom_call.1} parent=1 // pred_region
      %75 = dma.done [#allocation9], 1024
    $region37: #{tpu_custom_call.1} parent=1 // pred_fallthru
      _
    %v77 = vld [vmem:[%s4] sm:$0x1]
    %v78 = vld [vmem:[%s4 + $0x1] sm:$0x1]
    %v79 = vld [vmem:[%s4 + $0x2] sm:$0x1]
    %v80 = vld [vmem:[#allocation2] sm:$0xf]
    %v81 = vld [vmem:[#allocation2 + $0x4] sm:$0xf]
    %v82 = vld [vmem:[#allocation5] sm:$0xf]
    %v83 = vld [vmem:[#allocation5 + $0x4] sm:$0xf]
    %v84 = vld [vmem:[#allocation5 + $0x8] sm:$0xf]
    %v85 = vld [vmem:[#allocation5 + $0xc] sm:$0xf]
    %v86 = vld [vmem:[#allocation5 + $0x10] sm:$0xf]
    %v87 = vld [vmem:[#allocation5 + $0x14] sm:$0xf]
    %v88 = vld [vmem:[#allocation5 + $0x18] sm:$0xf]
    %v89 = vld [vmem:[#allocation5 + $0x1c] sm:$0xf]
    %v90 = vld [vmem:[#allocation5 + $0x20] sm:$0xf]
    %v91 = vld [vmem:[#allocation5 + $0x24] sm:$0xf]
    %v92 = vld [vmem:[#allocation5 + $0x28] sm:$0xf]
    %v93 = vld [vmem:[#allocation5 + $0x2c] sm:$0xf]
    %v94 = vld [vmem:[#allocation5 + $0x30] sm:$0xf]
    %v95 = vld [vmem:[#allocation5 + $0x34] sm:$0xf]
    %v96 = vld [vmem:[#allocation5 + $0x38] sm:$0xf]
    %v97 = vld [vmem:[#allocation5 + $0x3c] sm:$0xf]
    %v99 = vlaneseq
    %v100 = vshrl.u32 %v99, 7
    %v101 = vsub.s32 0, %v100
    %v102 = vrot.slane %v77, %v101
    %v106 = vunpack.c.l.b16 %v80
    %v107 = vunpack.c.l.b16 %v81
    %v108 = vpack.c.b16 %v107, %v106
    %v126 = vunpack.c.l.b16 %v82
    %v127 = vunpack.c.l.b16 %v83
    %v128 = vunpack.c.l.b16 %v84
    %v129 = vunpack.c.l.b16 %v85
    %v130 = vunpack.c.l.b16 %v86
    %v131 = vunpack.c.l.b16 %v87
    %v132 = vunpack.c.l.b16 %v88
    %v133 = vunpack.c.l.b16 %v89
    %v134 = vunpack.c.l.b16 %v90
    %v135 = vunpack.c.l.b16 %v91
    %v136 = vunpack.c.l.b16 %v92
    %v137 = vunpack.c.l.b16 %v93
    %v138 = vunpack.c.l.b16 %v94
    %v139 = vunpack.c.l.b16 %v95
    %v140 = vunpack.c.l.b16 %v96
    %v141 = vunpack.c.l.b16 %v97
    %v142 = vpack.c.b16 %v127, %v126
    %v143 = vpack.c.b16 %v129, %v128
    %v144 = vpack.c.b16 %v131, %v130
    %v145 = vpack.c.b16 %v133, %v132
    %v146 = vpack.c.b16 %v135, %v134
    %v147 = vpack.c.b16 %v137, %v136
    %v148 = vpack.c.b16 %v139, %v138
    %v149 = vpack.c.b16 %v141, %v140
    %158 = vmatprep.subr.bf16.mxu0 0
    %159 = vmatpush1.bf16.msra.mxu0 %v142
    %160 = vmatprep.subr.bf16.mxu0 0
    %161 = vmatpush1.bf16.msra.mxu0 %v143
    %162 = vmatprep.subr.bf16.mxu0 0
    %163 = vmatpush1.bf16.msra.mxu0 %v144
    %164 = vmatprep.subr.bf16.mxu0 0
    %165 = vmatpush1.bf16.msra.mxu0 %v145
    %166 = vmatprep.subr.bf16.mxu0 0
    %167 = vmatpush1.bf16.msra.mxu0 %v146
    %168 = vmatprep.subr.bf16.mxu0 0
    %169 = vmatpush1.bf16.msra.mxu0 %v147
    %170 = vmatprep.subr.bf16.mxu0 0
    %171 = vmatpush1.bf16.msra.mxu0 %v148
    %172 = vmatprep.subr.bf16.mxu0 0
    %173 = vmatpush1.bf16.msra.mxu0 %v149
    %174 = vmatprep.subr.bf16.mxu0 0
    %175 = vmatpush1.bf16.msra.mxu0 0
    %176 = vmatprep.subr.bf16.mxu0 0
    %177 = vmatpush1.bf16.msra.mxu0 0
    %178 = vmatprep.subr.bf16.mxu0 0
    %179 = vmatpush1.bf16.msra.mxu0 0
    %180 = vmatprep.subr.bf16.mxu0 0
    %181 = vmatpush1.bf16.msra.mxu0 0
    %182 = vmatprep.subr.bf16.mxu0 0
    %183 = vmatpush1.bf16.msra.mxu0 0
    %184 = vmatprep.subr.bf16.mxu0 0
    %185 = vmatpush1.bf16.msra.mxu0 0
    %186 = vmatprep.subr.bf16.mxu0 0
    %187 = vmatpush1.bf16.msra.mxu0 0
    %188 = vmatprep.subr.bf16.mxu0 0
    %189 = vmatpush1.bf16.msra.mxu0 0
    %190 = vmatprep.mubr.bf16.mxu0 0
    %191 = vmatmul.mubr.bf16.gmra.mrb[0].mxu0 %v108
    %v192 = vpop.f32.mrb[0].mxu0
    %v193 = vadd.f32 %v102, %v192
    %v194 = vpop.f32.mrb[0].mxu0
    %v195 = vpop.f32.mrb[0].mxu0
    %v196 = vadd.f32 %v102, %v195
    %v197 = vpop.f32.mrb[0].mxu0
    %198 = vdwg.mxu0
    %v199 = vmax.f32 %v193, 0.0
    %v200 = vmax.f32 %v196, 0.0
    %v201 = vpack.c.bf16 %v200, %v199
    %v202 = vld [vmem:[#allocation7] sm:$0xf]
    %v203 = vld [vmem:[#allocation7 + $0x4] sm:$0xf]
    %v204 = vld [vmem:[#allocation7 + $0x8] sm:$0xf]
    %v205 = vld [vmem:[#allocation7 + $0xc] sm:$0xf]
    %v206 = vld [vmem:[#allocation7 + $0x10] sm:$0xf]
    %v207 = vld [vmem:[#allocation7 + $0x14] sm:$0xf]
    %v208 = vld [vmem:[#allocation7 + $0x18] sm:$0xf]
    %v209 = vld [vmem:[#allocation7 + $0x1c] sm:$0xf]
    %v210 = vld [vmem:[#allocation7 + $0x20] sm:$0xf]
    %v211 = vld [vmem:[#allocation7 + $0x24] sm:$0xf]
    %v212 = vld [vmem:[#allocation7 + $0x28] sm:$0xf]
    %v213 = vld [vmem:[#allocation7 + $0x2c] sm:$0xf]
    %v214 = vld [vmem:[#allocation7 + $0x30] sm:$0xf]
    %v215 = vld [vmem:[#allocation7 + $0x34] sm:$0xf]
    %v216 = vld [vmem:[#allocation7 + $0x38] sm:$0xf]
    %v217 = vld [vmem:[#allocation7 + $0x3c] sm:$0xf]
    %v219 = vlaneseq
    %v220 = vshrl.u32 %v219, 7
    %v221 = vsub.s32 0, %v220
    %v222 = vrot.slane %v78, %v221
    %v240 = vunpack.c.l.b16 %v202
    %v241 = vunpack.c.l.b16 %v203
    %v242 = vunpack.c.l.b16 %v204
    %v243 = vunpack.c.l.b16 %v205
    %v244 = vunpack.c.l.b16 %v206
    %v245 = vunpack.c.l.b16 %v207
    %v246 = vunpack.c.l.b16 %v208
    %v247 = vunpack.c.l.b16 %v209
    %v248 = vunpack.c.l.b16 %v210
    %v249 = vunpack.c.l.b16 %v211
    %v250 = vunpack.c.l.b16 %v212
    %v251 = vunpack.c.l.b16 %v213
    %v252 = vunpack.c.l.b16 %v214
    %v253 = vunpack.c.l.b16 %v215
    %v254 = vunpack.c.l.b16 %v216
    %v255 = vunpack.c.l.b16 %v217
    %v256 = vpack.c.b16 %v241, %v240
    %v257 = vpack.c.b16 %v243, %v242
    %v258 = vpack.c.b16 %v245, %v244
    %v259 = vpack.c.b16 %v247, %v246
    %v260 = vpack.c.b16 %v249, %v248
    %v261 = vpack.c.b16 %v251, %v250
    %v262 = vpack.c.b16 %v253, %v252
    %v263 = vpack.c.b16 %v255, %v254
    %272 = vmatprep.subr.bf16.mxu0 0
    %273 = vmatpush1.bf16.msra.mxu0 %v256
    %274 = vmatprep.subr.bf16.mxu0 0
    %275 = vmatpush1.bf16.msra.mxu0 %v257
    %276 = vmatprep.subr.bf16.mxu0 0
    %277 = vmatpush1.bf16.msra.mxu0 %v258
    %278 = vmatprep.subr.bf16.mxu0 0
    %279 = vmatpush1.bf16.msra.mxu0 %v259
    %280 = vmatprep.subr.bf16.mxu0 0
    %281 = vmatpush1.bf16.msra.mxu0 %v260
    %282 = vmatprep.subr.bf16.mxu0 0
    %283 = vmatpush1.bf16.msra.mxu0 %v261
    %284 = vmatprep.subr.bf16.mxu0 0
    %285 = vmatpush1.bf16.msra.mxu0 %v262
    %286 = vmatprep.subr.bf16.mxu0 0
    %287 = vmatpush1.bf16.msra.mxu0 %v263
    %288 = vmatprep.subr.bf16.mxu0 0
    %289 = vmatpush1.bf16.msra.mxu0 0
    %290 = vmatprep.subr.bf16.mxu0 0
    %291 = vmatpush1.bf16.msra.mxu0 0
    %292 = vmatprep.subr.bf16.mxu0 0
    %293 = vmatpush1.bf16.msra.mxu0 0
    %294 = vmatprep.subr.bf16.mxu0 0
    %295 = vmatpush1.bf16.msra.mxu0 0
    %296 = vmatprep.subr.bf16.mxu0 0
    %297 = vmatpush1.bf16.msra.mxu0 0
    %298 = vmatprep.subr.bf16.mxu0 0
    %299 = vmatpush1.bf16.msra.mxu0 0
    %300 = vmatprep.subr.bf16.mxu0 0
    %301 = vmatpush1.bf16.msra.mxu0 0
    %302 = vmatprep.subr.bf16.mxu0 0
    %303 = vmatpush1.bf16.msra.mxu0 0
    %304 = vmatprep.mubr.bf16.mxu0 0
    %305 = vmatmul.mubr.bf16.gmra.mrb[0].mxu0 %v201
    %v306 = vpop.f32.mrb[0].mxu0
    %v307 = vadd.f32 %v222, %v306
    %v308 = vpop.f32.mrb[0].mxu0
    %v309 = vpop.f32.mrb[0].mxu0
    %v310 = vadd.f32 %v222, %v309
    %v311 = vpop.f32.mrb[0].mxu0
    %312 = vdwg.mxu0
    %v313 = vmax.f32 %v307, 0.0
    %v314 = vmax.f32 %v310, 0.0
    %v315 = vpack.c.bf16 %v314, %v313
    %v316 = vld [vmem:[#allocation8] sm:$0xf]
    %v317 = vld [vmem:[#allocation8 + $0x4] sm:$0xf]
    %v318 = vld [vmem:[#allocation8 + $0x8] sm:$0xf]
    %v319 = vld [vmem:[#allocation8 + $0xc] sm:$0xf]
    %v320 = vld [vmem:[#allocation8 + $0x10] sm:$0xf]
    %v321 = vld [vmem:[#allocation8 + $0x14] sm:$0xf]
    %v322 = vld [vmem:[#allocation8 + $0x18] sm:$0xf]
    %v323 = vld [vmem:[#allocation8 + $0x1c] sm:$0xf]
    %v324 = vld [vmem:[#allocation8 + $0x20] sm:$0xf]
    %v325 = vld [vmem:[#allocation8 + $0x24] sm:$0xf]
    %v326 = vld [vmem:[#allocation8 + $0x28] sm:$0xf]
    %v327 = vld [vmem:[#allocation8 + $0x2c] sm:$0xf]
    %v328 = vld [vmem:[#allocation8 + $0x30] sm:$0xf]
    %v329 = vld [vmem:[#allocation8 + $0x34] sm:$0xf]
    %v330 = vld [vmem:[#allocation8 + $0x38] sm:$0xf]
    %v331 = vld [vmem:[#allocation8 + $0x3c] sm:$0xf]
    %v333 = vlaneseq
    %v334 = vshrl.u32 %v333, 7
    %v335 = vsub.s32 0, %v334
    %v336 = vrot.slane %v79, %v335
    %v354 = vunpack.c.l.b16 %v316
    %v355 = vunpack.c.l.b16 %v317
    %v356 = vunpack.c.l.b16 %v318
    %v357 = vunpack.c.l.b16 %v319
    %v358 = vunpack.c.l.b16 %v320
    %v359 = vunpack.c.l.b16 %v321
    %v360 = vunpack.c.l.b16 %v322
    %v361 = vunpack.c.l.b16 %v323
    %v362 = vunpack.c.l.b16 %v324
    %v363 = vunpack.c.l.b16 %v325
    %v364 = vunpack.c.l.b16 %v326
    %v365 = vunpack.c.l.b16 %v327
    %v366 = vunpack.c.l.b16 %v328
    %v367 = vunpack.c.l.b16 %v329
    %v368 = vunpack.c.l.b16 %v330
    %v369 = vunpack.c.l.b16 %v331
    %v370 = vpack.c.b16 %v355, %v354
    %v371 = vpack.c.b16 %v357, %v356
    %v372 = vpack.c.b16 %v359, %v358
    %v373 = vpack.c.b16 %v361, %v360
    %v374 = vpack.c.b16 %v363, %v362
    %v375 = vpack.c.b16 %v365, %v364
    %v376 = vpack.c.b16 %v367, %v366
    %v377 = vpack.c.b16 %v369, %v368
    %386 = vmatprep.subr.bf16.mxu0 0
    %387 = vmatpush1.bf16.msra.mxu0 %v370
    %388 = vmatprep.subr.bf16.mxu0 0
    %389 = vmatpush1.bf16.msra.mxu0 %v371
    %390 = vmatprep.subr.bf16.mxu0 0
    %391 = vmatpush1.bf16.msra.mxu0 %v372
    %392 = vmatprep.subr.bf16.mxu0 0
    %393 = vmatpush1.bf16.msra.mxu0 %v373
    %394 = vmatprep.subr.bf16.mxu0 0
    %395 = vmatpush1.bf16.msra.mxu0 %v374
    %396 = vmatprep.subr.bf16.mxu0 0
    %397 = vmatpush1.bf16.msra.mxu0 %v375
    %398 = vmatprep.subr.bf16.mxu0 0
    %399 = vmatpush1.bf16.msra.mxu0 %v376
    %400 = vmatprep.subr.bf16.mxu0 0
    %401 = vmatpush1.bf16.msra.mxu0 %v377
    %402 = vmatprep.subr.bf16.mxu0 0
    %403 = vmatpush1.bf16.msra.mxu0 0
    %404 = vmatprep.subr.bf16.mxu0 0
    %405 = vmatpush1.bf16.msra.mxu0 0
    %406 = vmatprep.subr.bf16.mxu0 0
    %407 = vmatpush1.bf16.msra.mxu0 0
    %408 = vmatprep.subr.bf16.mxu0 0
    %409 = vmatpush1.bf16.msra.mxu0 0
    %410 = vmatprep.subr.bf16.mxu0 0
    %411 = vmatpush1.bf16.msra.mxu0 0
    %412 = vmatprep.subr.bf16.mxu0 0
    %413 = vmatpush1.bf16.msra.mxu0 0
    %414 = vmatprep.subr.bf16.mxu0 0
    %415 = vmatpush1.bf16.msra.mxu0 0
    %416 = vmatprep.subr.bf16.mxu0 0
    %417 = vmatpush1.bf16.msra.mxu0 0
    %418 = vmatprep.mubr.bf16.mxu0 0
    %419 = vmatmul.mubr.bf16.gmra.mrb[0].mxu0 %v315
    %v420 = vpop.f32.mrb[0].mxu0
    %v421 = vadd.f32 %v336, %v420
    %v422 = vpop.f32.mrb[0].mxu0
    %v423 = vpop.f32.mrb[0].mxu0
    %v424 = vadd.f32 %v336, %v423
    %v425 = vpop.f32.mrb[0].mxu0
    %426 = vdwg.mxu0
    %427 = vst [vmem:[#allocation10] sm:$0xff] %v421
    %428 = vst [vmem:[#allocation10 + $0x8] sm:$0xff] %v424
    // Predicated region
    $region38: #{tpu_custom_call.1} parent=1 // pred_check
      _
    $region39: #{tpu_custom_call.1} parent=1 // pred_check_branch
      %430 = sbr.rel (0) target = $region41
    $region40: #{tpu_custom_call.1} parent=1 // pred_region
      %s432 = ssub.s32 256, 256
      %433 = vsyncadd [#allocation4], %s432
      %s434 = sshll.u32 [#allocation10], 4
      %s435 = int_to_ptr.vmem [resolvable:$true] %s434
      %440 = dma.vmem_to_hbm [thread:$0]  %s435, 256, %s5, [#allocation4], 128, 128, 8
    $region41: #{tpu_custom_call.1} parent=1 // pred_fallthru
      _
    // Predicated region
    $region42: #{tpu_custom_call.1} parent=1 // pred_check
      _
    $region43: #{tpu_custom_call.1} parent=1 // pred_check_branch
      %442 = sbr.rel (0) target = $region45
    $region44: #{tpu_custom_call.1} parent=1 // pred_region
      %443 = dma.done [#allocation4], 256
    $region45: #{tpu_custom_call.1} parent=1 // pred_fallthru
      _
    %444 = vsyncpa [#allocation3], 1
    %445 = vsyncpa [#allocation6], 1
    %446 = vsyncpa [#allocation9], 1
    %447 = vsyncpa [#allocation4], 1

</llo_original>
